<compile_context>
chip_gen: v7x
topology: tpu7x:2x2x1
jax: 0.10.0
libtpu: 0.0.40
codegen_flags: <defaults>
</compile_context>

<pallas_src>
import jax
import jax.numpy as jnp
from jax.experimental import pallas as pl
from jax.experimental.pallas import tpu as pltpu


def _optical_kernel(sig_ref, trig_ref, out_ref):
    # Pure VPU complex multiply; memory-bound by design.
    sr = sig_ref[0]            # (T, PP)  static first-axis slice: free
    si = sig_ref[1]            # (T, PP)
    c = trig_ref[0]            # (1, PP)  resident across the whole grid (constant index_map)
    s = trig_ref[1]            # (1, PP)
    out_ref[0] = sr * c - si * s
    out_ref[1] = sr * s + si * c


def _round_up(x, m):
    return (x + m - 1) // m * m


def _block_rows_and_grid(bc, row_bytes, target_block_bytes=4 << 20):
    """Rows per stacked (2, T, PP) block and the grid size.

    ~4 MiB per stacked block (~2 MiB per re/im stream) amortizes the ~0.35 us/step
    pipeline overhead on v7x's 3.2 TB/s HBM; double-buffered in+out working set
    (~16 MiB) fits every generation once vmem_limit_bytes is raised explicitly.
    Guarantees >= 2 grid steps whenever possible so megacore sharding can kick in.
    """
    bc8 = _round_up(bc, 8)
    rows_target = max(8, (target_block_bytes // row_bytes) // 8 * 8)
    g = max(1, -(-bc8 // rows_target))          # cdiv
    if g == 1 and bc8 >= 16:
        g = 2                                   # >= 2 parallel steps for v7x's two TCs
    t = _round_up(-(-bc8 // g), 8)              # multiple of 8 sublanes, exact grid
    return t, g


@jax.jit
def optical_layer_forward(signal_complex, phase):
    """signal_complex: (B, C, P, P) complex64; phase: (1, 1, P, P) float32."""
    B, C, P, _ = signal_complex.shape
    BC, PP = B * C, P * P

    # Contiguous reshapes are free; real/imag extraction + pad + stack fuse into one
    # XLA pass producing the stacked planar buffer.
    sig_re = jnp.real(signal_complex).reshape(BC, PP)
    sig_im = jnp.imag(signal_complex).reshape(BC, PP)

    phase_flat = phase.reshape(1, PP).astype(jnp.float32)
    cos_p = jnp.cos(phase_flat)                 # hoisted out of the kernel (done once)
    sin_p = jnp.sin(phase_flat)

    # Lane-dense padding: keep the output last dim a multiple of 128 (unmasked vst path).
    PP_pad = _round_up(PP, 128)
    if PP_pad != PP:
        lanes = ((0, 0), (0, PP_pad - PP))
        sig_re = jnp.pad(sig_re, lanes)
        sig_im = jnp.pad(sig_im, lanes)
        cos_p = jnp.pad(cos_p, lanes)
        sin_p = jnp.pad(sin_p, lanes)

    # Row padding so the tiled grid is always exact (no single-giant-block fallback).
    row_bytes = 2 * PP_pad * 4                  # one stacked (re+im) row in bytes
    T, G = _block_rows_and_grid(BC, row_bytes)
    BC_pad = T * G
    if BC_pad != BC:
        rows = ((0, BC_pad - BC), (0, 0))
        sig_re = jnp.pad(sig_re, rows)
        sig_im = jnp.pad(sig_im, rows)

    sig = jnp.stack([sig_re, sig_im])           # (2, BC_pad, PP_pad)
    trig = jnp.stack([cos_p, sin_p]).reshape(2, 1, PP_pad)

    out = pl.pallas_call(
        _optical_kernel,
        out_shape=jax.ShapeDtypeStruct((2, BC_pad, PP_pad), jnp.float32),
        grid_spec=pltpu.PrefetchScalarGridSpec(
            num_scalar_prefetch=0,
            grid=(G,),
            in_specs=[
                pl.BlockSpec((2, T, PP_pad), lambda i: (0, i, 0)),    # stacked re/im
                pl.BlockSpec((2, 1, PP_pad), lambda i: (0, 0, 0)),    # cos/sin, resident
            ],
            out_specs=pl.BlockSpec((2, T, PP_pad), lambda i: (0, i, 0)),
        ),
        input_output_aliases={0: 0},            # reuse the stacked input HBM buffer
        compiler_params=pltpu.CompilerParams(
            dimension_semantics=("parallel",),
            vmem_limit_bytes=48 << 20,          # explicit: > v7x's 32 MiB scoped default
        ),
    )(sig, trig)

    out_re = out[0, :BC, :PP]
    out_im = out[1, :BC, :PP]
    out_c = jax.lax.complex(out_re, out_im)     # single merge pass, no 1j* multiply
    return out_c.reshape(B, C, P, P)


if __name__ == "__main__":
    B, C, P = 2, 4, 16
    key = jax.random.PRNGKey(0)
    k1, k2, k3 = jax.random.split(key, 3)

    # deterministic synthetic parameter (module would hold a learnable phase)
    phase = jax.random.normal(k3, (1, 1, P, P), dtype=jnp.float32)

    sig_re = jax.random.normal(k1, (B, C, P, P), dtype=jnp.float32)
    sig_im = jax.random.normal(k2, (B, C, P, P), dtype=jnp.float32)
    signal = (sig_re + 1j * sig_im).astype(jnp.complex64)

    out = optical_layer_forward(signal, phase)
    out = jax.block_until_ready(out)

    # reference check against plain JAX (same math as the PyTorch forward)
    ref = signal * jnp.exp(1j * phase).astype(jnp.complex64)
    assert out.shape == (B, C, P, P)
    assert out.dtype == jnp.complex64
    assert jnp.max(jnp.abs(out - ref)) < 1e-5

    print("KERNEL_OK")
</pallas_src>

<mosaic_0001>
module attributes {stable_mosaic.version = 11 : i64} {
  func.func @_optical_kernel(%arg0: i32, %arg1: memref<2x8x256xf32, #tpu.memory_space<vmem>>, %arg2: memref<2x1x256xf32, #tpu.memory_space<vmem>>, %arg3: memref<2x8x256xf32, #tpu.memory_space<vmem>>) attributes {dimension_semantics = [#tpu.dimension_semantics<parallel>], iteration_bounds = array<i64: 1>, scalar_prefetch = 0 : i64, scratch_operands = 0 : i64, tpu.core_type = #tpu.core_type<tc>, window_params = [{transform_indices = @transform_0, window_bounds = array<i64: 2, 8, 256>}, {pipeline_mode = #tpu.pipeline_mode<synchronous>, transform_indices = @transform_1, window_bounds = array<i64: 2, 1, 256>}, {transform_indices = @transform_2, window_bounds = array<i64: 2, 8, 256>}]} {
    %c0 = arith.constant 0 : index
    %c0_0 = arith.constant 0 : index
    %c0_1 = arith.constant 0 : index
    %0 = vector.load %arg1[%c0, %c0_0, %c0_1] : memref<2x8x256xf32, #tpu.memory_space<vmem>>, vector<1x8x256xf32>
    %1 = vector.shape_cast %0 : vector<1x8x256xf32> to vector<8x256xf32>
    %c1 = arith.constant 1 : index
    %c0_2 = arith.constant 0 : index
    %c0_3 = arith.constant 0 : index
    %2 = vector.load %arg1[%c1, %c0_2, %c0_3] : memref<2x8x256xf32, #tpu.memory_space<vmem>>, vector<1x8x256xf32>
    %3 = vector.shape_cast %2 : vector<1x8x256xf32> to vector<8x256xf32>
    %c0_4 = arith.constant 0 : index
    %c0_5 = arith.constant 0 : index
    %c0_6 = arith.constant 0 : index
    %4 = vector.load %arg2[%c0_4, %c0_5, %c0_6] : memref<2x1x256xf32, #tpu.memory_space<vmem>>, vector<1x1x256xf32>
    %5 = vector.shape_cast %4 : vector<1x1x256xf32> to vector<1x256xf32>
    %c1_7 = arith.constant 1 : index
    %c0_8 = arith.constant 0 : index
    %c0_9 = arith.constant 0 : index
    %6 = vector.load %arg2[%c1_7, %c0_8, %c0_9] : memref<2x1x256xf32, #tpu.memory_space<vmem>>, vector<1x1x256xf32>
    %7 = vector.shape_cast %6 : vector<1x1x256xf32> to vector<1x256xf32>
    %8 = vector.broadcast %5 : vector<1x256xf32> to vector<8x256xf32>
    %9 = arith.mulf %1, %8 : vector<8x256xf32>
    %10 = vector.broadcast %7 : vector<1x256xf32> to vector<8x256xf32>
    %11 = arith.mulf %3, %10 : vector<8x256xf32>
    %12 = arith.subf %9, %11 : vector<8x256xf32>
    %c0_10 = arith.constant 0 : index
    %c0_11 = arith.constant 0 : index
    %c0_12 = arith.constant 0 : index
    %13 = vector.load %arg3[%c0_10, %c0_11, %c0_12] : memref<2x8x256xf32, #tpu.memory_space<vmem>>, vector<1x8x256xf32>
    %14 = vector.shape_cast %13 : vector<1x8x256xf32> to vector<8x256xf32>
    %15 = vector.shape_cast %12 : vector<8x256xf32> to vector<1x8x256xf32>
    tpu.vector_store %arg3[%c0_10, %c0_11, %c0_12], %15 {strides = array<i32>} : memref<2x8x256xf32, #tpu.memory_space<vmem>>, vector<1x8x256xf32>,
    %16 = vector.broadcast %7 : vector<1x256xf32> to vector<8x256xf32>
    %17 = arith.mulf %1, %16 : vector<8x256xf32>
    %18 = vector.broadcast %5 : vector<1x256xf32> to vector<8x256xf32>
    %19 = arith.mulf %3, %18 : vector<8x256xf32>
    %20 = arith.addf %17, %19 : vector<8x256xf32>
    %c1_13 = arith.constant 1 : index
    %c0_14 = arith.constant 0 : index
    %c0_15 = arith.constant 0 : index
    %21 = vector.load %arg3[%c1_13, %c0_14, %c0_15] : memref<2x8x256xf32, #tpu.memory_space<vmem>>, vector<1x8x256xf32>
    %22 = vector.shape_cast %21 : vector<1x8x256xf32> to vector<8x256xf32>
    %23 = vector.shape_cast %20 : vector<8x256xf32> to vector<1x8x256xf32>
    tpu.vector_store %arg3[%c1_13, %c0_14, %c0_15], %23 {strides = array<i32>} : memref<2x8x256xf32, #tpu.memory_space<vmem>>, vector<1x8x256xf32>,
    return
  }
  func.func @transform_0(%arg0: i32) -> (i32, i32, i32) {
    %c0_i32 = arith.constant 0 : i32
    %c0_i32_0 = arith.constant 0 : i32
    %c0_i32_1 = arith.constant 0 : i32
    return %c0_i32, %arg0, %c0_i32_0 : i32, i32, i32
  }
  func.func @transform_1(%arg0: i32) -> (i32, i32, i32) {
    %c0_i32 = arith.constant 0 : i32
    %c0_i32_0 = arith.constant 0 : i32
    %c0_i32_1 = arith.constant 0 : i32
    %c0_i32_2 = arith.constant 0 : i32
    return %c0_i32, %c0_i32_0, %c0_i32_1 : i32, i32, i32
  }
  func.func @transform_2(%arg0: i32) -> (i32, i32, i32) {
    %c0_i32 = arith.constant 0 : i32
    %c0_i32_0 = arith.constant 0 : i32
    %c0_i32_1 = arith.constant 0 : i32
    return %c0_i32, %arg0, %c0_i32_0 : i32, i32, i32
  }
}

</mosaic_0001>

<llo_original>
// kernel: custom-call.1
$region0: #{custom-call.1}
  %s0 = inlined_call_operand.hbm [shape: c64[2,4,16,16], index: 0, kind: input, shape index: {}]
  %s1 = inlined_call_operand.vmem [shape: f32[2,4,16,16], index: 1, kind: output, shape index: {}]
  %s2 = scalar_lea.hbm %s0, 2048
  $region1: #{custom-call.1} parent=0
    #allocation0 [shape = 's32[1]{0}', space=sflag, size = 0x4, scoped, tag = 'scoped memory for custom-call.1']
    %3 = vsyncpa [#allocation0], 0
    %s4 = sshll.u32 %s1, 4
    %s5 = int_to_ptr.vmem [resolvable:$true] %s4
    %7 = dma.hbm_to_vmem [thread:$0]  %s2, 2048, %s5, [#allocation0]
    %8 = dma.done [#allocation0], 2048
    %9 = vsyncpa [#allocation0], 1

// kernel: custom-call
$region0: #{custom-call}
  %s0 = inlined_call_operand.hbm [shape: c64[2,4,16,16], index: 0, kind: input, shape index: {}]
  %s1 = inlined_call_operand.vmem [shape: f32[2,4,16,16], index: 1, kind: output, shape index: {}]
  $region1: #{custom-call} parent=0
    #allocation0 [shape = 's32[1]{0}', space=sflag, size = 0x4, scoped, tag = 'scoped memory for custom-call']
    %2 = vsyncpa [#allocation0], 0
    %s3 = sshll.u32 %s1, 4
    %s4 = int_to_ptr.vmem [resolvable:$true] %s3
    %6 = dma.hbm_to_vmem [thread:$0]  %s0, 2048, %s4, [#allocation0]
    %7 = dma.done [#allocation0], 2048
    %8 = vsyncpa [#allocation0], 1

// kernel: custom-call.2
$region0: #{custom-call.2}
  %s0 = inlined_call_operand.vmem [shape: f32[2,4,16,16], index: 0, kind: input, shape index: {}]
  %s1 = inlined_call_operand.vmem [shape: f32[2,4,16,16], index: 1, kind: input, shape index: {}]
  %s2 = inlined_call_operand.hbm [shape: c64[2,4,16,16], index: 2, kind: output, shape index: {}]
  %s3 = scalar_lea.hbm %s2, 2048
  $region1: #{custom-call.2} parent=0
    #allocation0 [shape = 's32[1]{0}', space=sflag, size = 0x4, scoped, tag = 'scoped memory for custom-call.2']
    %4 = vsyncpa [#allocation0], 0
    %s5 = sshll.u32 %s0, 4
    %s6 = int_to_ptr.vmem [resolvable:$true] %s5
    %8 = dma.vmem_to_hbm [thread:$0]  %s6, 2048, %s2, [#allocation0]
    %9 = dma.done [#allocation0], 2048
    %10 = vsyncpa [#allocation0], 1
  $region2: #{custom-call.2} parent=0
    #allocation1 [shape = 's32[1]{0}', space=sflag, size = 0x4, scoped, tag = 'scoped memory for custom-call.2']
    %11 = vsyncpa [#allocation1], 0
    %s12 = sshll.u32 %s1, 4
    %s13 = int_to_ptr.vmem [resolvable:$true] %s12
    %15 = dma.vmem_to_hbm [thread:$0]  %s13, 2048, %s3, [#allocation1]
    %16 = dma.done [#allocation1], 2048
    %17 = vsyncpa [#allocation1], 1

// kernel: optical_layer_forward.1
$region0: #{optical_layer_forward.1}
  #allocation0 [shape = 'u32[]', space=smem, size = 0x4, offset = 0x4, fixed_abs, tag = 'smem constant byte address 0x4 - core index']
  #allocation1 [shape = 'u32[144,128]{1,0:T(1,128)}', space=vmem, size = 0x12000, scoped, tag = 'internal scratch']
  %s0 = inlined_call_operand.vmem [shape: f32[2,8,256], index: 0, kind: input, shape index: {}, may-alias: {0,2}]
  %s1 = inlined_call_operand.vmem [shape: f32[2,1,256], index: 1, kind: input, shape index: {}]
  %s2 = inlined_call_operand.vmem [shape: f32[2,8,256], index: 2, kind: output, shape index: {}, may-alias: {0,2}]
  %s3 = sld [smem:[#allocation0]]
  $region18: #{optical_layer_forward.1} parent=0
    _
  %s5 = ssub.s32 1, %s3
  %s6 = scalar_select 0, %s5, %s3
  // Predicated region
  $region2: #{optical_layer_forward.1} parent=0 // pred_check
    _
  $region3: #{optical_layer_forward.1} parent=0 // pred_check_branch
    %8 = sbr.rel (0) target = $region5
  $region4: #{optical_layer_forward.1} parent=0 // pred_region
    _
  $region5: #{optical_layer_forward.1} parent=0 // pred_fallthru
    _
  // Predicated region
  $region6: #{optical_layer_forward.1} parent=0 // pred_check
    _
  $region7: #{optical_layer_forward.1} parent=0 // pred_check_branch
    %10 = sbr.rel (0) target = $region9
  $region8: #{optical_layer_forward.1} parent=0 // pred_region
    _
  $region9: #{optical_layer_forward.1} parent=0 // pred_fallthru
    _
  %v11 = vld [vmem:[%s0] sm:$0xff]
  %v12 = vld [vmem:[%s0 + $0x8] sm:$0xff]
  %s13 = scalar_lea.vmem %s0, 16
  %v14 = vld [vmem:[%s13] sm:$0xff]
  %v15 = vld [vmem:[%s13 + $0x8] sm:$0xff]
  %v16 = vld [vmem:[%s1] sm:$0x3]
  %s17 = scalar_lea.vmem %s1, 2
  %v18 = vld [vmem:[%s17] sm:$0x3]
  %v20 = vlaneseq
  %v21 = vshrl.u32 %v20, 7
  %v22 = vsub.s32 0, %v21
  %v23 = vrot.slane %v16, %v22
  %v24 = vlaneseq
  %v25 = vshrl.u32 %v24, 7
  %v26 = vsub.s32 1, %v25
  %v27 = vrot.slane %v16, %v26
  %v30 = vmul.f32 %v11, %v23
  %v31 = vmul.f32 %v12, %v27
  %v33 = vlaneseq
  %v34 = vshrl.u32 %v33, 7
  %v35 = vsub.s32 0, %v34
  %v36 = vrot.slane %v18, %v35
  %v37 = vlaneseq
  %v38 = vshrl.u32 %v37, 7
  %v39 = vsub.s32 1, %v38
  %v40 = vrot.slane %v18, %v39
  %v43 = vmul.f32 %v14, %v36
  %v44 = vmul.f32 %v15, %v40
  %v45 = vsub.f32 %v30, %v43
  %v46 = vsub.f32 %v31, %v44
  %47 = vst [vmem:[%s2] sm:$0xff] %v45
  %48 = vst [vmem:[%s2 + $0x8] sm:$0xff] %v46
  %v49 = vmul.f32 %v11, %v36
  %v50 = vmul.f32 %v12, %v40
  %v51 = vmul.f32 %v14, %v23
  %v52 = vmul.f32 %v15, %v27
  %v53 = vadd.f32 %v49, %v51
  %v54 = vadd.f32 %v50, %v52
  %s55 = scalar_lea.vmem %s2, 16
  %56 = vst [vmem:[%s55] sm:$0xff] %v53
  %57 = vst [vmem:[%s55 + $0x8] sm:$0xff] %v54
  // Predicated region
  $region10: #{optical_layer_forward.1} parent=0 // pred_check
    _
  $region11: #{optical_layer_forward.1} parent=0 // pred_check_branch
    %59 = sbr.rel (0) target = $region13
  $region12: #{optical_layer_forward.1} parent=0 // pred_region
    _
  $region13: #{optical_layer_forward.1} parent=0 // pred_fallthru
    _
  // Predicated region
  $region14: #{optical_layer_forward.1} parent=0 // pred_check
    _
  $region15: #{optical_layer_forward.1} parent=0 // pred_check_branch
    %61 = sbr.rel (0) target = $region17
  $region16: #{optical_layer_forward.1} parent=0 // pred_region
    _
  $region17: #{optical_layer_forward.1} parent=0 // pred_fallthru
    _

</llo_original>
